<compile_context>
chip_gen: v5e
topology: v5e:2x2
jax: 0.10.0
libtpu: 0.0.40
codegen_flags: <defaults>
</compile_context>

<pallas_src>
import math

import jax
import jax.numpy as jnp
from jax.experimental import pallas as pl
from jax.experimental.pallas import tpu as pltpu

# Module hyper-parameters (deterministic, from __init__ defaults).
BCE_W = 0.3
DICE_W = 0.5
FOCAL_W = 0.2
REG_W = 1e-5
FOCAL_ALPHA = 0.65
FOCAL_GAMMA = 2.0          # realised as omt*omt below
FOCAL_EPS = 1e-6
FOCAL_CAP = -math.log(FOCAL_EPS)   # clamp on -log(prob)
DICE_SMOOTH = 1e-6

PAD_LOGIT = -1.0e4         # pad (logit, target=0) contributes exactly 0 to all stats
MAX_CHUNK_ROWS = 2048      # 2048*128*4B = 1 MiB per input tile


def _loss_stats_kernel(x_ref, t_ref, out_ref):
    """One (chunk_rows, 128) tile of one sample.

    x_ref/t_ref: (chunk_rows, 128) tiles (batch dim squeezed).
    out_ref:     (5, 8, 128) f32 accumulator, resident across the chunk axis.
      stat 0: sum of BCE-with-logits terms
      stat 1: sum of focal terms
      stat 2: dice intersection  sum(p*t)
      stat 3: sum(p)
      stat 4: sum(t)
    """
    c = pl.program_id(1)

    @pl.when(c == 0)
    def _():
        out_ref[...] = jnp.zeros_like(out_ref)

    x = x_ref[...].astype(jnp.float32)
    t = t_ref[...].astype(jnp.float32)

    # --- collapsed transcendental chain: exp, log1p, reciprocal only ---
    e = jnp.exp(-jnp.abs(x))                 # exp(-|x|)
    sp = jnp.log1p(e)                        # softplus(-|x|)
    inv = pl.reciprocal(1.0 + e)             # exact reciprocal
    p = jnp.where(x >= 0, inv, e * inv)      # sigmoid(x), numerically stable

    # -log(sigmoid(x)) and -log(1 - sigmoid(x)), exact for all x.
    nlp = sp + jnp.maximum(-x, 0.0)
    nlp1 = sp + jnp.maximum(x, 0.0)

    # nn.BCEWithLogitsLoss elementwise (== max(x,0) - x*t + log1p(exp(-|x|))).
    bce_elem = t * nlp + (1.0 - t) * nlp1

    # FocalLoss elementwise (alpha=0.65, gamma=2.0, eps clamp on probs),
    # exact for arbitrary t in [0,1]; clamp(p,eps) -> min(-log p, -log eps).
    pt = t * p + (1.0 - t) * (1.0 - p)
    omt = 1.0 - pt
    focal_w = omt * omt                      # gamma == 2.0, avoid lax.pow
    f_bce = (FOCAL_ALPHA * t * jnp.minimum(nlp, FOCAL_CAP)
             + (1.0 - FOCAL_ALPHA) * (1.0 - t) * jnp.minimum(nlp1, FOCAL_CAP))
    focal_elem = focal_w * f_bce

    def accumulate(idx, elem):
        # (chunk_rows, 128) -> vreg-wise partial sum (8, 128); pure VPU adds.
        partial = jnp.sum(elem.reshape(-1, 8, 128), axis=0)
        out_ref[idx, :, :] = out_ref[idx, :, :] + partial

    accumulate(0, bce_elem)
    accumulate(1, focal_elem)
    accumulate(2, p * t)
    accumulate(3, p)
    accumulate(4, t)


def _per_batch_stats(logits, targets, *, max_chunk_rows=MAX_CHUNK_ROWS):
    """Returns per-sample (bce_sum, focal_sum, intersection, prob_sum, tgt_sum)."""
    B = logits.shape[0]
    N = math.prod(logits.shape[1:])

    x = logits.reshape(B, N)
    t = targets.reshape(B, N)

    rows = -(-N // 128)                                   # ceil(N / 128)
    chunk_rows = min(max_chunk_rows, ((rows + 7) // 8) * 8)
    total_rows = -(-rows // chunk_rows) * chunk_rows      # multiple of chunk_rows
    pad = total_rows * 128 - N
    if pad:
        # Pad with (logit = large negative, target = 0): contributes exactly 0
        # to every accumulated statistic.
        x = jnp.pad(x, ((0, 0), (0, pad)), constant_values=PAD_LOGIT)
        t = jnp.pad(t, ((0, 0), (0, pad)), constant_values=0)

    x = x.reshape(B, total_rows, 128)
    t = t.reshape(B, total_rows, 128)
    num_chunks = total_rows // chunk_rows

    in_spec = pl.BlockSpec((None, chunk_rows, 128), lambda b, c: (b, c, 0))
    out_spec = pl.BlockSpec((None, 5, 8, 128), lambda b, c: (b, 0, 0, 0))

    partials = pl.pallas_call(
        _loss_stats_kernel,
        out_shape=jax.ShapeDtypeStruct((B, 5, 8, 128), jnp.float32),
        grid_spec=pltpu.PrefetchScalarGridSpec(
            num_scalar_prefetch=0,
            grid=(B, num_chunks),
            in_specs=[in_spec, in_spec],
            out_specs=out_spec,
        ),
        compiler_params=pltpu.CompilerParams(
            dimension_semantics=("parallel", "arbitrary"),
        ),
    )(x, t)

    stats = jnp.sum(partials, axis=(2, 3))                # (B, 5) tiny host-side reduce
    return tuple(stats[:, i] for i in range(5)), N


def improved_combined_loss(logits, targets, model_params=None, *,
                           max_chunk_rows=MAX_CHUNK_ROWS):
    """Matches ImprovedCombinedLoss(...)(logits, targets, model) with defaults."""
    if targets.ndim == 3:
        targets = targets[:, None, :, :]
    if not jnp.issubdtype(targets.dtype, jnp.floating):
        targets = targets.astype(jnp.float32)
    # Keep native dtypes (bf16 inputs stay bf16 on the wire); kernel upcasts to f32.

    (bce_s, foc_s, inter_s, psum_s, tsum_s), N = _per_batch_stats(
        logits, targets, max_chunk_rows=max_chunk_rows)
    B = logits.shape[0]
    total = float(B * N)

    bce_loss = jnp.sum(bce_s) / total
    focal_loss = jnp.sum(foc_s) / total
    dice = (2.0 * inter_s + DICE_SMOOTH) / (psum_s + tsum_s + DICE_SMOOTH)
    dice_loss = 1.0 - jnp.mean(dice)

    # TODO(synk): L2 regularisation over model parameters is plain JAX glue
    # (there is no in-kernel model); pos_weight path (None by default) untouched.
    reg_loss = 0.0
    if model_params is not None and REG_W > 0:
        leaves = jax.tree_util.tree_leaves(model_params)
        if leaves:
            reg_loss = sum(jnp.sum(jnp.square(p)) for p in leaves)
            param_count = sum(p.size for p in leaves)
            reg_loss = reg_loss / param_count

    return (BCE_W * bce_loss + DICE_W * dice_loss
            + FOCAL_W * focal_loss + REG_W * reg_loss)


def _reference_loss(logits, targets):
    """Pure-JAX reference mirroring the PyTorch module (for sanity checking)."""
    if targets.ndim == 3:
        targets = targets[:, None, :, :]
    x = logits.astype(jnp.float32)
    t = targets.astype(jnp.float32)
    p = jax.nn.sigmoid(x)

    bce = jnp.mean(jnp.maximum(x, 0.0) - x * t + jnp.log1p(jnp.exp(-jnp.abs(x))))

    B = x.shape[0]
    pf, tf = p.reshape(B, -1), t.reshape(B, -1)
    inter = jnp.sum(pf * tf, axis=1)
    union = jnp.sum(pf, axis=1) + jnp.sum(tf, axis=1)
    dice = 1.0 - jnp.mean((2.0 * inter + DICE_SMOOTH) / (union + DICE_SMOOTH))

    pt = t * p + (1.0 - t) * (1.0 - p)
    alpha_t = FOCAL_ALPHA * t + (1.0 - FOCAL_ALPHA) * (1.0 - t)
    f_bce = -alpha_t * (t * jnp.log(jnp.clip(p, FOCAL_EPS))
                        + (1.0 - t) * jnp.log(jnp.clip(1.0 - p, FOCAL_EPS)))
    focal = jnp.mean(((1.0 - pt) ** FOCAL_GAMMA) * f_bce)

    return BCE_W * bce + DICE_W * dice + FOCAL_W * focal


if __name__ == "__main__":
    key = jax.random.PRNGKey(0)

    def make_case(k, shape):
        k1, k2 = jax.random.split(k)
        logits = jax.random.normal(k1, shape, dtype=jnp.float32)
        targets = (jax.random.uniform(k2, shape) > 0.5).astype(jnp.float32)
        return logits, targets

    # (shape, max_chunk_rows): exercise sublane padding, element padding, and the
    # multi-chunk accumulator path respectively.
    cases = [
        ((2, 1, 16, 16), MAX_CHUNK_ROWS),
        ((2, 3, 10, 10), MAX_CHUNK_ROWS),
        ((2, 2, 32, 32), 8),
    ]
    keys = jax.random.split(key, len(cases) + 2)
    for (shape, mcr), k in zip(cases, keys[:len(cases)]):
        logits, targets = make_case(k, shape)
        loss = jax.block_until_ready(
            improved_combined_loss(logits, targets, model_params=None,
                                   max_chunk_rows=mcr))
        ref = jax.block_until_ready(_reference_loss(logits, targets))
        assert jnp.allclose(loss, ref, rtol=1e-4, atol=1e-6), (shape, loss, ref)

    # L2 regularisation glue path (pure JAX, outside the kernel).
    params = {"w": jax.random.normal(keys[-2], (32, 16), jnp.float32),
              "b": jnp.zeros((16,), jnp.float32)}
    logits, targets = make_case(keys[-1], (2, 1, 16, 16))
    loss_reg = jax.block_until_ready(improved_combined_loss(logits, targets, params))
    leaves = jax.tree_util.tree_leaves(params)
    reg = sum(jnp.sum(jnp.square(p)) for p in leaves) / sum(p.size for p in leaves)
    ref_reg = jax.block_until_ready(_reference_loss(logits, targets) + REG_W * reg)
    assert jnp.allclose(loss_reg, ref_reg, rtol=1e-4, atol=1e-6), (loss_reg, ref_reg)

    print("KERNEL_OK")
</pallas_src>

<mosaic_0001>
module attributes {stable_mosaic.version = 11 : i64} {
  func.func @_loss_stats_kernel(%arg0: i32, %arg1: i32, %arg2: memref<1x8x128xf32, #tpu.memory_space<vmem>>, %arg3: memref<1x8x128xf32, #tpu.memory_space<vmem>>, %arg4: memref<1x5x8x128xf32, #tpu.memory_space<vmem>>) attributes {dimension_semantics = [#tpu.dimension_semantics<parallel>, #tpu.dimension_semantics<arbitrary>], iteration_bounds = array<i64: 2, 1>, scalar_prefetch = 0 : i64, scratch_operands = 0 : i64, tpu.core_type = #tpu.core_type<tc>, window_params = [{transform_indices = @transform_0, window_bounds = array<i64: 1, 8, 128>}, {transform_indices = @transform_1, window_bounds = array<i64: 1, 8, 128>}, {transform_indices = @transform_2, window_bounds = array<i64: 1, 5, 8, 128>}]} {
    %c0_i32 = arith.constant 0 : i32
    %0 = arith.cmpi eq, %arg1, %c0_i32 : i32
    %1 = arith.extui %0 : i1 to i32
    %c0_i32_0 = arith.constant 0 : i32
    %2 = arith.cmpi ne, %1, %c0_i32_0 : i32
    scf.if %2 {
      %cst_61 = arith.constant 0.000000e+00 : f32
      %97 = vector.broadcast %cst_61 : f32 to vector<5x8x128xf32>
      %c0_62 = arith.constant 0 : index
      %c0_63 = arith.constant 0 : index
      %c0_64 = arith.constant 0 : index
      %c0_65 = arith.constant 0 : index
      %98 = vector.load %arg4[%c0_62, %c0_63, %c0_64, %c0_65] : memref<1x5x8x128xf32, #tpu.memory_space<vmem>>, vector<1x5x8x128xf32>
      %99 = vector.shape_cast %98 : vector<1x5x8x128xf32> to vector<5x8x128xf32>
      %100 = vector.shape_cast %97 : vector<5x8x128xf32> to vector<1x5x8x128xf32>
      tpu.vector_store %arg4[%c0_62, %c0_63, %c0_64, %c0_65], %100 {strides = array<i32>} : memref<1x5x8x128xf32, #tpu.memory_space<vmem>>, vector<1x5x8x128xf32>,
    } else {
    }
    %c0 = arith.constant 0 : index
    %c0_1 = arith.constant 0 : index
    %c0_2 = arith.constant 0 : index
    %3 = vector.load %arg2[%c0, %c0_1, %c0_2] : memref<1x8x128xf32, #tpu.memory_space<vmem>>, vector<1x8x128xf32>
    %4 = vector.shape_cast %3 : vector<1x8x128xf32> to vector<8x128xf32>
    %c0_3 = arith.constant 0 : index
    %c0_4 = arith.constant 0 : index
    %c0_5 = arith.constant 0 : index
    %5 = vector.load %arg3[%c0_3, %c0_4, %c0_5] : memref<1x8x128xf32, #tpu.memory_space<vmem>>, vector<1x8x128xf32>
    %6 = vector.shape_cast %5 : vector<1x8x128xf32> to vector<8x128xf32>
    %7 = math.absf %4 : vector<8x128xf32>
    %cst = arith.constant 0.000000e+00 : f32
    %8 = vector.broadcast %cst : f32 to vector<8x128xf32>
    %9 = arith.subf %8, %7 : vector<8x128xf32>
    %10 = math.exp %9 : vector<8x128xf32>
    %11 = math.log1p %10 : vector<8x128xf32>
    %cst_6 = arith.constant 1.000000e+00 : f32
    %12 = vector.broadcast %cst_6 : f32 to vector<8x128xf32>
    %13 = arith.addf %12, %10 : vector<8x128xf32>
    %14 = tpu.reciprocal %13 : vector<8x128xf32> -> vector<8x128xf32>
    %cst_7 = arith.constant 0.000000e+00 : f32
    %15 = vector.broadcast %cst_7 : f32 to vector<8x128xf32>
    %16 = arith.cmpf oge, %4, %15 : vector<8x128xf32>
    %17 = arith.mulf %10, %14 : vector<8x128xf32>
    %18 = arith.select %16, %14, %17 : vector<8x128xi1>, vector<8x128xf32>
    %cst_8 = arith.constant 0.000000e+00 : f32
    %19 = vector.broadcast %cst_8 : f32 to vector<8x128xf32>
    %20 = arith.subf %19, %4 : vector<8x128xf32>
    %cst_9 = arith.constant 0.000000e+00 : f32
    %21 = vector.broadcast %cst_9 : f32 to vector<8x128xf32>
    %22 = arith.maximumf %20, %21 : vector<8x128xf32>
    %23 = arith.addf %11, %22 : vector<8x128xf32>
    %cst_10 = arith.constant 0.000000e+00 : f32
    %24 = vector.broadcast %cst_10 : f32 to vector<8x128xf32>
    %25 = arith.maximumf %4, %24 : vector<8x128xf32>
    %26 = arith.addf %11, %25 : vector<8x128xf32>
    %27 = arith.mulf %6, %23 : vector<8x128xf32>
    %cst_11 = arith.constant 1.000000e+00 : f32
    %28 = vector.broadcast %cst_11 : f32 to vector<8x128xf32>
    %29 = arith.subf %28, %6 : vector<8x128xf32>
    %30 = arith.mulf %29, %26 : vector<8x128xf32>
    %31 = arith.addf %27, %30 : vector<8x128xf32>
    %32 = arith.mulf %6, %18 : vector<8x128xf32>
    %cst_12 = arith.constant 1.000000e+00 : f32
    %33 = vector.broadcast %cst_12 : f32 to vector<8x128xf32>
    %34 = arith.subf %33, %6 : vector<8x128xf32>
    %cst_13 = arith.constant 1.000000e+00 : f32
    %35 = vector.broadcast %cst_13 : f32 to vector<8x128xf32>
    %36 = arith.subf %35, %18 : vector<8x128xf32>
    %37 = arith.mulf %34, %36 : vector<8x128xf32>
    %38 = arith.addf %32, %37 : vector<8x128xf32>
    %cst_14 = arith.constant 1.000000e+00 : f32
    %39 = vector.broadcast %cst_14 : f32 to vector<8x128xf32>
    %40 = arith.subf %39, %38 : vector<8x128xf32>
    %41 = arith.mulf %40, %40 : vector<8x128xf32>
    %cst_15 = arith.constant 6.500000e-01 : f32
    %42 = vector.broadcast %cst_15 : f32 to vector<8x128xf32>
    %43 = arith.mulf %42, %6 : vector<8x128xf32>
    %cst_16 = arith.constant 13.8155107 : f32
    %44 = vector.broadcast %cst_16 : f32 to vector<8x128xf32>
    %45 = arith.minimumf %23, %44 : vector<8x128xf32>
    %46 = arith.mulf %43, %45 : vector<8x128xf32>
    %cst_17 = arith.constant 1.000000e+00 : f32
    %47 = vector.broadcast %cst_17 : f32 to vector<8x128xf32>
    %48 = arith.subf %47, %6 : vector<8x128xf32>
    %cst_18 = arith.constant 3.500000e-01 : f32
    %49 = vector.broadcast %cst_18 : f32 to vector<8x128xf32>
    %50 = arith.mulf %49, %48 : vector<8x128xf32>
    %cst_19 = arith.constant 13.8155107 : f32
    %51 = vector.broadcast %cst_19 : f32 to vector<8x128xf32>
    %52 = arith.minimumf %26, %51 : vector<8x128xf32>
    %53 = arith.mulf %50, %52 : vector<8x128xf32>
    %54 = arith.addf %46, %53 : vector<8x128xf32>
    %55 = arith.mulf %41, %54 : vector<8x128xf32>
    %56 = vector.shape_cast %31 : vector<8x128xf32> to vector<1x8x128xf32>
    %cst_20 = arith.constant dense<0.000000e+00> : vector<8x128xf32>
    %57 = vector.multi_reduction <add>, %56, %cst_20 [0] : vector<1x8x128xf32> to vector<8x128xf32>
    %c0_21 = arith.constant 0 : index
    %c0_22 = arith.constant 0 : index
    %c0_23 = arith.constant 0 : index
    %c0_24 = arith.constant 0 : index
    %58 = vector.load %arg4[%c0_21, %c0_22, %c0_23, %c0_24] : memref<1x5x8x128xf32, #tpu.memory_space<vmem>>, vector<1x1x8x128xf32>
    %59 = vector.shape_cast %58 : vector<1x1x8x128xf32> to vector<8x128xf32>
    %60 = arith.addf %59, %57 : vector<8x128xf32>
    %c0_25 = arith.constant 0 : index
    %c0_26 = arith.constant 0 : index
    %c0_27 = arith.constant 0 : index
    %c0_28 = arith.constant 0 : index
    %61 = vector.load %arg4[%c0_25, %c0_26, %c0_27, %c0_28] : memref<1x5x8x128xf32, #tpu.memory_space<vmem>>, vector<1x1x8x128xf32>
    %62 = vector.shape_cast %61 : vector<1x1x8x128xf32> to vector<8x128xf32>
    %63 = vector.shape_cast %60 : vector<8x128xf32> to vector<1x1x8x128xf32>
    tpu.vector_store %arg4[%c0_25, %c0_26, %c0_27, %c0_28], %63 {strides = array<i32>} : memref<1x5x8x128xf32, #tpu.memory_space<vmem>>, vector<1x1x8x128xf32>,
    %64 = vector.shape_cast %55 : vector<8x128xf32> to vector<1x8x128xf32>
    %cst_29 = arith.constant dense<0.000000e+00> : vector<8x128xf32>
    %65 = vector.multi_reduction <add>, %64, %cst_29 [0] : vector<1x8x128xf32> to vector<8x128xf32>
    %c0_30 = arith.constant 0 : index
    %c1 = arith.constant 1 : index
    %c0_31 = arith.constant 0 : index
    %c0_32 = arith.constant 0 : index
    %66 = vector.load %arg4[%c0_30, %c1, %c0_31, %c0_32] : memref<1x5x8x128xf32, #tpu.memory_space<vmem>>, vector<1x1x8x128xf32>
    %67 = vector.shape_cast %66 : vector<1x1x8x128xf32> to vector<8x128xf32>
    %68 = arith.addf %67, %65 : vector<8x128xf32>
    %c0_33 = arith.constant 0 : index
    %c1_34 = arith.constant 1 : index
    %c0_35 = arith.constant 0 : index
    %c0_36 = arith.constant 0 : index
    %69 = vector.load %arg4[%c0_33, %c1_34, %c0_35, %c0_36] : memref<1x5x8x128xf32, #tpu.memory_space<vmem>>, vector<1x1x8x128xf32>
    %70 = vector.shape_cast %69 : vector<1x1x8x128xf32> to vector<8x128xf32>
    %71 = vector.shape_cast %68 : vector<8x128xf32> to vector<1x1x8x128xf32>
    tpu.vector_store %arg4[%c0_33, %c1_34, %c0_35, %c0_36], %71 {strides = array<i32>} : memref<1x5x8x128xf32, #tpu.memory_space<vmem>>, vector<1x1x8x128xf32>,
    %72 = arith.mulf %18, %6 : vector<8x128xf32>
    %73 = vector.shape_cast %72 : vector<8x128xf32> to vector<1x8x128xf32>
    %cst_37 = arith.constant dense<0.000000e+00> : vector<8x128xf32>
    %74 = vector.multi_reduction <add>, %73, %cst_37 [0] : vector<1x8x128xf32> to vector<8x128xf32>
    %c0_38 = arith.constant 0 : index
    %c2 = arith.constant 2 : index
    %c0_39 = arith.constant 0 : index
    %c0_40 = arith.constant 0 : index
    %75 = vector.load %arg4[%c0_38, %c2, %c0_39, %c0_40] : memref<1x5x8x128xf32, #tpu.memory_space<vmem>>, vector<1x1x8x128xf32>
    %76 = vector.shape_cast %75 : vector<1x1x8x128xf32> to vector<8x128xf32>
    %77 = arith.addf %76, %74 : vector<8x128xf32>
    %c0_41 = arith.constant 0 : index
    %c2_42 = arith.constant 2 : index
    %c0_43 = arith.constant 0 : index
    %c0_44 = arith.constant 0 : index
    %78 = vector.load %arg4[%c0_41, %c2_42, %c0_43, %c0_44] : memref<1x5x8x128xf32, #tpu.memory_space<vmem>>, vector<1x1x8x128xf32>
    %79 = vector.shape_cast %78 : vector<1x1x8x128xf32> to vector<8x128xf32>
    %80 = vector.shape_cast %77 : vector<8x128xf32> to vector<1x1x8x128xf32>
    tpu.vector_store %arg4[%c0_41, %c2_42, %c0_43, %c0_44], %80 {strides = array<i32>} : memref<1x5x8x128xf32, #tpu.memory_space<vmem>>, vector<1x1x8x128xf32>,
    %81 = vector.shape_cast %18 : vector<8x128xf32> to vector<1x8x128xf32>
    %cst_45 = arith.constant dense<0.000000e+00> : vector<8x128xf32>
    %82 = vector.multi_reduction <add>, %81, %cst_45 [0] : vector<1x8x128xf32> to vector<8x128xf32>
    %c0_46 = arith.constant 0 : index
    %c3 = arith.constant 3 : index
    %c0_47 = arith.constant 0 : index
    %c0_48 = arith.constant 0 : index
    %83 = vector.load %arg4[%c0_46, %c3, %c0_47, %c0_48] : memref<1x5x8x128xf32, #tpu.memory_space<vmem>>, vector<1x1x8x128xf32>
    %84 = vector.shape_cast %83 : vector<1x1x8x128xf32> to vector<8x128xf32>
    %85 = arith.addf %84, %82 : vector<8x128xf32>
    %c0_49 = arith.constant 0 : index
    %c3_50 = arith.constant 3 : index
    %c0_51 = arith.constant 0 : index
    %c0_52 = arith.constant 0 : index
    %86 = vector.load %arg4[%c0_49, %c3_50, %c0_51, %c0_52] : memref<1x5x8x128xf32, #tpu.memory_space<vmem>>, vector<1x1x8x128xf32>
    %87 = vector.shape_cast %86 : vector<1x1x8x128xf32> to vector<8x128xf32>
    %88 = vector.shape_cast %85 : vector<8x128xf32> to vector<1x1x8x128xf32>
    tpu.vector_store %arg4[%c0_49, %c3_50, %c0_51, %c0_52], %88 {strides = array<i32>} : memref<1x5x8x128xf32, #tpu.memory_space<vmem>>, vector<1x1x8x128xf32>,
    %89 = vector.shape_cast %6 : vector<8x128xf32> to vector<1x8x128xf32>
    %cst_53 = arith.constant dense<0.000000e+00> : vector<8x128xf32>
    %90 = vector.multi_reduction <add>, %89, %cst_53 [0] : vector<1x8x128xf32> to vector<8x128xf32>
    %c0_54 = arith.constant 0 : index
    %c4 = arith.constant 4 : index
    %c0_55 = arith.constant 0 : index
    %c0_56 = arith.constant 0 : index
    %91 = vector.load %arg4[%c0_54, %c4, %c0_55, %c0_56] : memref<1x5x8x128xf32, #tpu.memory_space<vmem>>, vector<1x1x8x128xf32>
    %92 = vector.shape_cast %91 : vector<1x1x8x128xf32> to vector<8x128xf32>
    %93 = arith.addf %92, %90 : vector<8x128xf32>
    %c0_57 = arith.constant 0 : index
    %c4_58 = arith.constant 4 : index
    %c0_59 = arith.constant 0 : index
    %c0_60 = arith.constant 0 : index
    %94 = vector.load %arg4[%c0_57, %c4_58, %c0_59, %c0_60] : memref<1x5x8x128xf32, #tpu.memory_space<vmem>>, vector<1x1x8x128xf32>
    %95 = vector.shape_cast %94 : vector<1x1x8x128xf32> to vector<8x128xf32>
    %96 = vector.shape_cast %93 : vector<8x128xf32> to vector<1x1x8x128xf32>
    tpu.vector_store %arg4[%c0_57, %c4_58, %c0_59, %c0_60], %96 {strides = array<i32>} : memref<1x5x8x128xf32, #tpu.memory_space<vmem>>, vector<1x1x8x128xf32>,
    return
  }
  func.func @transform_0(%arg0: i32, %arg1: i32) -> (i32, i32, i32) {
    %c0_i32 = arith.constant 0 : i32
    %c0_i32_0 = arith.constant 0 : i32
    return %arg0, %arg1, %c0_i32 : i32, i32, i32
  }
  func.func @transform_1(%arg0: i32, %arg1: i32) -> (i32, i32, i32) {
    %c0_i32 = arith.constant 0 : i32
    %c0_i32_0 = arith.constant 0 : i32
    return %arg0, %arg1, %c0_i32 : i32, i32, i32
  }
  func.func @transform_2(%arg0: i32, %arg1: i32) -> (i32, i32, i32, i32) {
    %c0_i32 = arith.constant 0 : i32
    %c0_i32_0 = arith.constant 0 : i32
    %c0_i32_1 = arith.constant 0 : i32
    %c0_i32_2 = arith.constant 0 : i32
    return %arg0, %c0_i32, %c0_i32_0, %c0_i32_1 : i32, i32, i32, i32
  }
}

</mosaic_0001>

<llo_original>
// kernel: tpu_custom_call.1
$region0: #{tpu_custom_call.1}
  #allocation0 [shape = 'u32[]', space=smem, size = 0x4, offset = 0x4, fixed_abs, tag = 'smem constant byte address 0x4 - core index']
  #allocation1 [shape = 'u32[72,128]{1,0:T(1,128)}', space=vmem, size = 0x9000, scoped, tag = 'internal scratch']
  %s0 = inlined_call_operand.hbm [shape: f32[2,8,128], index: 0, kind: input, shape index: {}]
  %s1 = inlined_call_operand.hbm [shape: f32[2,8,128], index: 1, kind: input, shape index: {}]
  %s2 = inlined_call_operand.hbm [shape: f32[2,5,8,128], index: 2, kind: output, shape index: {}]
  %s3 = sld [smem:[#allocation0]]
  $region53: #{tpu_custom_call.1} parent=0
    _
  %s5 = ssub.s32 1, %s3
  %s6 = scalar_select 0, %s5, %s3
  $region1: #{tpu_custom_call.1} parent=0
    #allocation2 [shape = 'u8[8192]{0}', space=vmem, size = 0x2000, scoped, tag = 'input window, operand 0']
    #allocation3 [shape = 's32[2]{0}', space=sflag, size = 0x8, scoped, tag = 'scoped memory for tpu_custom_call.1']
    #allocation4 [shape = 's32[2]{0}', space=sflag, size = 0x8, scoped, tag = 'scoped memory for tpu_custom_call.1']
    #allocation5 [shape = 'u8[8192]{0}', space=vmem, size = 0x2000, scoped, tag = 'input window, operand 1']
    #allocation6 [shape = 's32[2]{0}', space=sflag, size = 0x8, scoped, tag = 'scoped memory for tpu_custom_call.1']
    #allocation7 [shape = 'u8[40960]{0}', space=vmem, size = 0xa000, scoped, tag = 'output window, operand 0']
    %7 = vsyncpa [#allocation3], 0
    %s8 = scalar_lea.sflag [#allocation3], 1
    %9 = vsyncpa %s8, 0
    %10 = vsyncpa [#allocation6], 0
    %s11 = scalar_lea.sflag [#allocation6], 1
    %12 = vsyncpa %s11, 0
    %13 = vsyncpa [#allocation4], 0
    %s14 = scalar_lea.sflag [#allocation4], 1
    %15 = vsyncpa %s14, 0
    loop: start=0, step=1, limit=4
    $region2: #{tpu_custom_call.1} parent=1 // loop_pre_header
      _
    $region3: #{tpu_custom_call.1} parent=1 // loop_header
      %s17 = sphi 0, %s21
      %p18 = scmp.ge.s32.totalorder %s17, 4
      %s24 = sphi 0, %s36
      %s25 = sphi 0, %s32
      %s26 = sphi 0, %s24
      %s27 = sphi 0, %s25
      %s28 = sphi 0, %s26
      %s29 = sphi 0, %s27
      %s41 = sphi 0, %s43
      %s44 = sphi 0, %s41
      %s45 = sphi 0, %s44
      %s61 = sphi 0, %s45
      %s69 = sphi 0, %s71
      %s72 = sphi 0, %s69
      %s73 = sphi 0, %s72
      %s89 = sphi 0, %s73
      %s95 = sphi 0, %s97
      %s98 = sphi 0, %s95
      %s99 = sphi 0, %s98
      %s115 = sphi 0, %s99
    $region4: #{tpu_custom_call.1} parent=1 // loop_header_branch
      %20 = sbr.rel (%p18) target = $region8
    $region5: #{tpu_custom_call.1} parent=1 // loop_body
      %s22 = ssub.s32 %s17, 1
      %s23 = ssub.s32 %s17, 2
      %s30 = sadd.s32 1, %s25
      %p31 = scmp.ge.s32.totalorder %s30, 1
      %s32 = scalar_select %p31, 0, %s30
      %s33 = sadd.s32 1, %s24
      %s34 = scalar_select %p31, %s33, %s24
      %p35 = scmp.ge.s32.totalorder %s34, 2
      %s36 = scalar_select %p35, 0, %s34
      %s37 = ssub.s32 %s24, %s36
      %s38 = ssub.s32 %s25, %s32
      %s39 = sor.u32 %s37, %s38
      %p40 = scmp.eq.s32.totalorder %s39, 0
      %s42 = sadd.s32 %s41, 1
      %s43 = scalar_select %p40, %s41, %s42
      %p46 = pneg %p40
      %p47 = scmp.eq.s32.totalorder %s17, 1
      %p48 = por %p46, %p47
      %p49 = scmp.ne.s32.totalorder %s41, %s44
      %p50 = scmp.eq.s32.totalorder %s17, 0
      %p51 = por %p49, %p50
      %p52 = scmp.ne.s32.totalorder %s41, %s44
      %p53 = scmp.eq.s32.totalorder %s22, 1
      %p54 = por %p52, %p53
      %p55 = scmp.ne.s32.totalorder %s44, %s45
      %p56 = scmp.eq.s32.totalorder %s22, 0
      %p57 = por %p55, %p56
      %p58 = scmp.ne.s32.totalorder %s44, %s45
      %p59 = scmp.eq.s32.totalorder %s23, 1
      %p60 = por %p58, %p59
      %p62 = scmp.ne.s32.totalorder %s45, %s61
      %p63 = scmp.eq.s32.totalorder %s23, 0
      %p64 = por %p62, %p63
      %s65 = ssub.s32 %s24, %s36
      %s66 = ssub.s32 %s25, %s32
      %s67 = sor.u32 %s65, %s66
      %p68 = scmp.eq.s32.totalorder %s67, 0
      %s70 = sadd.s32 %s69, 1
      %s71 = scalar_select %p68, %s69, %s70
      %p74 = pneg %p68
      %p75 = scmp.eq.s32.totalorder %s17, 1
      %p76 = por %p74, %p75
      %p77 = scmp.ne.s32.totalorder %s69, %s72
      %p78 = scmp.eq.s32.totalorder %s17, 0
      %p79 = por %p77, %p78
      %p80 = scmp.ne.s32.totalorder %s69, %s72
      %p81 = scmp.eq.s32.totalorder %s22, 1
      %p82 = por %p80, %p81
      %p83 = scmp.ne.s32.totalorder %s72, %s73
      %p84 = scmp.eq.s32.totalorder %s22, 0
      %p85 = por %p83, %p84
      %p86 = scmp.ne.s32.totalorder %s72, %s73
      %p87 = scmp.eq.s32.totalorder %s23, 1
      %p88 = por %p86, %p87
      %p90 = scmp.ne.s32.totalorder %s73, %s89
      %p91 = scmp.eq.s32.totalorder %s23, 0
      %p92 = por %p90, %p91
      %s93 = ssub.s32 %s24, %s36
      %p94 = scmp.eq.s32.totalorder %s93, 0
      %s96 = sadd.s32 %s95, 1
      %s97 = scalar_select %p94, %s95, %s96
      %p100 = pneg %p94
      %p101 = scmp.eq.s32.totalorder %s17, 1
      %p102 = por %p100, %p101
      %p103 = scmp.ne.s32.totalorder %s95, %s98
      %p104 = scmp.eq.s32.totalorder %s17, 0
      %p105 = por %p103, %p104
      %p106 = scmp.ne.s32.totalorder %s95, %s98
      %p107 = scmp.eq.s32.totalorder %s22, 1
      %p108 = por %p106, %p107
      %p109 = scmp.ne.s32.totalorder %s98, %s99
      %p110 = scmp.eq.s32.totalorder %s22, 0
      %p111 = por %p109, %p110
      %p112 = scmp.ne.s32.totalorder %s98, %s99
      %p113 = scmp.eq.s32.totalorder %s23, 1
      %p114 = por %p112, %p113
      %p116 = scmp.ne.s32.totalorder %s99, %s115
      %p117 = scmp.eq.s32.totalorder %s23, 0
      %p118 = por %p116, %p117
      %p119 = scmp.le.s32.totalorder 1, %s17
      %p120 = scmp.lt.s32.totalorder %s17, 3
      %p121 = pnand %p119, %p120
      %p122 = pneg %p121
      // Predicated region
      $region9: #{tpu_custom_call.1} parent=5 // pred_check
        _
      $region10: #{tpu_custom_call.1} parent=5 // pred_check_branch
        %124 = sbr.rel (%p121) target = $region12
      $region11: #{tpu_custom_call.1} parent=5 // pred_region
        %s125 = ssub.s32 %s17, 1
      $region12: #{tpu_custom_call.1} parent=5 // pred_fallthru
        _
      %p126 = scmp.lt.s32.totalorder %s17, 2
      // Predicated region
      $region13: #{tpu_custom_call.1} parent=5 // pred_check
        %p127 = pneg %p126
      $region14: #{tpu_custom_call.1} parent=5 // pred_check_branch
        %129 = sbr.rel (%p127) target = $region16
      $region15: #{tpu_custom_call.1} parent=5 // pred_region
        // Predicated region
        $region17: #{tpu_custom_call.1} parent=15 // pred_check
          %p130 = pneg %p51
        $region18: #{tpu_custom_call.1} parent=15 // pred_check_branch
          %132 = sbr.rel (%p130) target = $region20
        $region19: #{tpu_custom_call.1} parent=15 // pred_region
          %s133 = sand.u32 %s41, 1
          %s134 = scalar_lea.sflag [#allocation3], %s133
          %s135 = sand.u32 %s41, 1
          %s136 = smul.addr %s135, 8
          %s137 = scalar_lea.vmem [#allocation2], %s136
          %139 = vsyncadd %s134, 0
          %s140 = sadd.s32 %s25, %s24
          %s141 = smul.addr %s140, 8
          %s142 = scalar_lea.hbm %s0, %s141
          %s144 = sshll.u32 %s142, 4
          %s145 = int_to_ptr.hbm [resolvable:$true] %s144
          %s146 = sshll.u32 %s137, 4
          %s147 = int_to_ptr.vmem [resolvable:$true] %s146
          %149 = dma.hbm_to_vmem [thread:$0]  %s145, 128, %s147, %s134
        $region20: #{tpu_custom_call.1} parent=15 // pred_fallthru
          _
        // Predicated region
        $region21: #{tpu_custom_call.1} parent=15 // pred_check
          %p150 = pneg %p79
        $region22: #{tpu_custom_call.1} parent=15 // pred_check_branch
          %152 = sbr.rel (%p150) target = $region24
        $region23: #{tpu_custom_call.1} parent=15 // pred_region
          %s153 = sand.u32 %s69, 1
          %s154 = scalar_lea.sflag [#allocation6], %s153
          %s155 = sand.u32 %s69, 1
          %s156 = smul.addr %s155, 8
          %s157 = scalar_lea.vmem [#allocation5], %s156
          %159 = vsyncadd %s154, 0
          %s160 = sadd.s32 %s25, %s24
          %s161 = smul.addr %s160, 8
          %s162 = scalar_lea.hbm %s1, %s161
          %s164 = sshll.u32 %s162, 4
          %s165 = int_to_ptr.hbm [resolvable:$true] %s164
          %s166 = sshll.u32 %s157, 4
          %s167 = int_to_ptr.vmem [resolvable:$true] %s166
          %169 = dma.hbm_to_vmem [thread:$0]  %s165, 128, %s167, %s154
        $region24: #{tpu_custom_call.1} parent=15 // pred_fallthru
          _
      $region16: #{tpu_custom_call.1} parent=5 // pred_fallthru
        _
      %p170 = scmp.le.s32.totalorder 1, %s17
      %p171 = scmp.lt.s32.totalorder %s17, 3
      %p172 = pnand %p170, %p171
      %p173 = pneg %p172
      // Predicated region
      $region25: #{tpu_custom_call.1} parent=5 // pred_check
        _
      $region26: #{tpu_custom_call.1} parent=5 // pred_check_branch
        %175 = sbr.rel (%p172) target = $region28
      $region27: #{tpu_custom_call.1} parent=5 // pred_region
        %s176 = ssub.s32 %s17, 1
        %s177 = sand.u32 %s44, 1
        %s178 = scalar_lea.sflag [#allocation3], %s177
        %s179 = sand.u32 %s44, 1
        %s180 = smul.addr %s179, 8
        %s181 = scalar_lea.vmem [#allocation2], %s180
        // Predicated region
        $region29: #{tpu_custom_call.1} parent=27 // pred_check
          %p182 = pneg %p57
        $region30: #{tpu_custom_call.1} parent=27 // pred_check_branch
          %184 = sbr.rel (%p182) target = $region32
        $region31: #{tpu_custom_call.1} parent=27 // pred_region
          %186 = dma.done %s178, 128
        $region32: #{tpu_custom_call.1} parent=27 // pred_fallthru
          _
        %s187 = sand.u32 %s72, 1
        %s188 = scalar_lea.sflag [#allocation6], %s187
        %s189 = sand.u32 %s72, 1
        %s190 = smul.addr %s189, 8
        %s191 = scalar_lea.vmem [#allocation5], %s190
        // Predicated region
        $region33: #{tpu_custom_call.1} parent=27 // pred_check
          %p192 = pneg %p85
        $region34: #{tpu_custom_call.1} parent=27 // pred_check_branch
          %194 = sbr.rel (%p192) target = $region36
        $region35: #{tpu_custom_call.1} parent=27 // pred_region
          %196 = dma.done %s188, 128
        $region36: #{tpu_custom_call.1} parent=27 // pred_fallthru
          _
        %s197 = sand.u32 %s44, 1
        %s198 = scalar_lea.sflag [#allocation3], %s197
        %s199 = sand.u32 %s44, 1
        %s200 = smul.addr %s199, 8
        %s201 = scalar_lea.vmem [#allocation2], %s200
        %p202 = pneg %p57
        %p203 = pneg %p54
        %s204 = sand.u32 %s72, 1
        %s205 = scalar_lea.sflag [#allocation6], %s204
        %s206 = sand.u32 %s72, 1
        %s207 = smul.addr %s206, 8
        %s208 = scalar_lea.vmem [#allocation5], %s207
        %p209 = pneg %p85
        %p210 = pneg %p82
        %p211 = pneg %p111
        %p212 = pneg %p108
        %s213 = sand.u32 %s98, 1
        %s214 = scalar_lea.sflag [#allocation4], %s213
        %s215 = sand.u32 %s98, 1
        %s216 = smul.addr %s215, 40
        %s217 = scalar_lea.vmem [#allocation7], %s216
        %p218 = scmp.eq.s32.totalorder %s27, 0
        // Predicated region
        $region37: #{tpu_custom_call.1} parent=27 // pred_check
          %p219 = pneg %p218
        $region38: #{tpu_custom_call.1} parent=27 // pred_check_branch
          %221 = sbr.rel (%p219) target = $region40
        $region39: #{tpu_custom_call.1} parent=27 // pred_region
          %222 = vst [vmem:[%s217] sm:$0xff] 0.0
          %223 = vst [vmem:[%s217 + $0x8] sm:$0xff] 0.0
          %224 = vst [vmem:[%s217 + $0x10] sm:$0xff] 0.0
          %225 = vst [vmem:[%s217 + $0x18] sm:$0xff] 0.0
          %226 = vst [vmem:[%s217 + $0x20] sm:$0xff] 0.0
        $region40: #{tpu_custom_call.1} parent=27 // pred_fallthru
          _
        %v227 = vld [vmem:[%s181] sm:$0xff]
        %v228 = vld [vmem:[%s191] sm:$0xff]
        %v229 = vand.u32 2147483647, %v227
        %v230 = vsub.f32 0.0, %v229
        %v231 = vmul.f32 %v230, 1.442695
        %v232 = vpow.pop %v231
        %v233 = vadd.f32 %v232, 1.0
        %v234 = vlog2.pop %v233
        %v235 = vmul.f32 %v234, 0.6931472
        %v236 = vmul.f32 -0.5, %v232
        %v237 = vadd.f32 %v236, 1.0
        %v238 = vmul.f32 %v237, %v232
        %v239 = vand.u32 2147483647, %v232
        %vm240 = vcmp.lt.f32.partialorder %v239, 0.0004427343
        %v241 = vsel %vm240, %v238, %v235
        %v242 = vadd.f32 %v232, 1.0
        %v243 = vrcp.pop %v242
        %v244 = vmul.f32 %v242, %v243
        %v245 = vsub.f32 1.0, %v244
        %v246 = vmul.f32 %v243, %v245
        %v247 = vadd.f32 %v243, %v246
        %vm248 = vweird.f32 %v242
        %vm249 = vweird.f32 %v243
        %vm250 = vmor %vm248, %vm249
        %v251 = vsel %vm250, %v243, %v247
        %v252 = vand.u32 2147483647, %v242
        %vm253 = vcmp.eq.f32.partialorder %v252, 8.507059e+37
        %v254 = vand.u32 %v242, 2147483648
        %v255 = vor.u32 1.1754944e-38, %v254
        %v256 = vsel %vm253, %v255, %v251
        %vm257 = vcmp.ge.f32.partialorder %v227, 0.0
        %v258 = vmul.f32 %v232, %v256
        %v259 = vsel %vm257, %v256, %v258
        %v260 = vsub.f32 0.0, %v227
        %v261 = vmax.f32 %v260, 0.0
        %v262 = vadd.f32 %v241, %v261
        %v263 = vmax.f32 %v227, 0.0
        %v264 = vadd.f32 %v241, %v263
        %v265 = vmul.f32 %v228, %v262
        %v266 = vsub.f32 1.0, %v228
        %v267 = vmul.f32 %v266, %v264
        %v268 = vadd.f32 %v265, %v267
        %v269 = vmul.f32 %v228, %v259
        %v270 = vsub.f32 1.0, %v259
        %v271 = vmul.f32 %v266, %v270
        %v272 = vadd.f32 %v269, %v271
        %v273 = vsub.f32 1.0, %v272
        %v274 = vmul.f32 %v273, %v273
        %v275 = vmul.f32 %v228, 0.65
        %v276 = vmin.f32 %v262, 13.815511
        %v277 = vmul.f32 %v275, %v276
        %v278 = vmul.f32 %v266, 0.35
        %v279 = vmin.f32 %v264, 13.815511
        %v280 = vmul.f32 %v278, %v279
        %v281 = vadd.f32 %v277, %v280
        %v282 = vmul.f32 %v274, %v281
        %v283 = vadd.f32 %v268, 0.0
        %v284 = vld [vmem:[%s217] sm:$0xff]
        %v285 = vadd.f32 %v284, %v283
        %286 = vst [vmem:[%s217] sm:$0xff] %v285
        %v287 = vadd.f32 %v282, 0.0
        %s288 = scalar_lea.vmem %s217, 8 [#allocation7]
        %v289 = vld [vmem:[%s288] sm:$0xff]
        %v290 = vadd.f32 %v289, %v287
        %291 = vst [vmem:[%s288] sm:$0xff] %v290
        %v292 = vadd.f32 %v269, 0.0
        %s293 = scalar_lea.vmem %s217, 16 [#allocation7]
        %v294 = vld [vmem:[%s293] sm:$0xff]
        %v295 = vadd.f32 %v294, %v292
        %296 = vst [vmem:[%s293] sm:$0xff] %v295
        %v297 = vadd.f32 %v259, 0.0
        %s298 = scalar_lea.vmem %s217, 24 [#allocation7]
        %v299 = vld [vmem:[%s298] sm:$0xff]
        %v300 = vadd.f32 %v299, %v297
        %301 = vst [vmem:[%s298] sm:$0xff] %v300
        %v302 = vadd.f32 %v228, 0.0
        %s303 = scalar_lea.vmem %s217, 32 [#allocation7]
        %v304 = vld [vmem:[%s303] sm:$0xff]
        %v305 = vadd.f32 %v304, %v302
        %306 = vst [vmem:[%s303] sm:$0xff] %v305
        %s307 = sand.u32 %s98, 1
        %s308 = scalar_lea.sflag [#allocation4], %s307
        %s309 = sand.u32 %s98, 1
        %s310 = smul.addr %s309, 40
        %s311 = scalar_lea.vmem [#allocation7], %s310
        // Predicated region
        $region41: #{tpu_custom_call.1} parent=27 // pred_check
          %p312 = pneg %p108
        $region42: #{tpu_custom_call.1} parent=27 // pred_check_branch
          %314 = sbr.rel (%p312) target = $region44
        $region43: #{tpu_custom_call.1} parent=27 // pred_region
          %316 = vsyncadd %s308, 0
          %s317 = smul.addr %s26, 5
          %s318 = smul.addr %s317, 8
          %s319 = scalar_lea.hbm %s2, %s318
          %s320 = sshll.u32 %s311, 4
          %s321 = int_to_ptr.vmem [resolvable:$true] %s320
          %s322 = sshll.u32 %s319, 4
          %s323 = int_to_ptr.hbm [resolvable:$true] %s322
          %328 = dma.vmem_to_hbm [thread:$0]  %s321, 640, %s323, %s308, 128, 128, 8
        $region44: #{tpu_custom_call.1} parent=27 // pred_fallthru
          _
      $region28: #{tpu_custom_call.1} parent=5 // pred_fallthru
        _
      %p329 = scmp.le.s32.totalorder 2, %s17
      // Predicated region
      $region45: #{tpu_custom_call.1} parent=5 // pred_check
        %p330 = pneg %p329
      $region46: #{tpu_custom_call.1} parent=5 // pred_check_branch
        %332 = sbr.rel (%p330) target = $region48
      $region47: #{tpu_custom_call.1} parent=5 // pred_region
        %s333 = ssub.s32 %s17, 2
        // Predicated region
        $region49: #{tpu_custom_call.1} parent=47 // pred_check
          %p334 = pneg %p114
        $region50: #{tpu_custom_call.1} parent=47 // pred_check_branch
          %336 = sbr.rel (%p334) target = $region52
        $region51: #{tpu_custom_call.1} parent=47 // pred_region
          %s337 = sand.u32 %s99, 1
          %s338 = scalar_lea.sflag [#allocation4], %s337
          %s339 = sand.u32 %s99, 1
          %s340 = smul.addr %s339, 40
          %s341 = scalar_lea.vmem [#allocation7], %s340
          %343 = dma.done %s338, 640
        $region52: #{tpu_custom_call.1} parent=47 // pred_fallthru
          _
      $region48: #{tpu_custom_call.1} parent=5 // pred_fallthru
        _
    $region6: #{tpu_custom_call.1} parent=1 // loop_footer
      %s21 = sadd.s32 1, %s17
    $region7: #{tpu_custom_call.1} parent=1 // loop_footer_branch
      %16 = sbr.rel target = $region3
    $region8: #{tpu_custom_call.1} parent=1 // loop_exit
      _
    %344 = vsyncpa [#allocation3], 1
    %s345 = scalar_lea.sflag [#allocation3], 1
    %346 = vsyncpa %s345, 1
    %347 = vsyncpa [#allocation6], 1
    %s348 = scalar_lea.sflag [#allocation6], 1
    %349 = vsyncpa %s348, 1
    %350 = vsyncpa [#allocation4], 1
    %s351 = scalar_lea.sflag [#allocation4], 1
    %352 = vsyncpa %s351, 1

</llo_original>
